<compile_context>
chip_gen: v7x
topology: tpu7x:2x2x1
jax: 0.10.0
libtpu: 0.0.40
codegen_flags: <defaults>
</compile_context>

<pallas_src>
import functools

import jax
import jax.numpy as jnp
from jax import lax
from jax.experimental import pallas as pl
from jax.experimental.pallas import tpu as pltpu


# ----------------------------------------------------------------------------
# Pallas kernel: one full bottleneck block for a single batch element.
# All tensors are channel-major (C, H*W): 256-lane-dense minor dim everywhere.
# ----------------------------------------------------------------------------
def _bottleneck_kernel(H, W, x_ref, mask_ref, w1_ref, b1_ref, w2_ref, b2_ref,
                       w3_ref, b3_ref, out_ref, patch_ref):
    HW = H * W
    W1 = w1_ref.shape[0]

    x = x_ref[0]                                            # (Cin, HW) f32

    # --- stage 1: 1x1 conv (BN1 scale folded into w1) + bias + ReLU --------
    o1 = jnp.dot(w1_ref[...], x.astype(jnp.bfloat16),
                 preferred_element_type=jnp.float32)        # (W1, HW)
    o1 = jnp.maximum(o1 + b1_ref[...], 0.0)

    # --- stage 2: 3x3 conv (pad=1) as ONE K=9*W1 matmul ---------------------
    # Taps are lane rolls of o1 (XLU slot) multiplied by precomputed border
    # masks (1 VPU mul per border tap), packed into the (9*W1, HW) scratch.
    # The scratch is fully overwritten every grid step -> no zero-init.
    k = 0
    for dh in (-1, 0, 1):
        for dw in (-1, 0, 1):
            off = dh * W + dw
            if off == 0:
                tap = o1
            else:
                src = pltpu.roll(o1, shift=(-off) % HW, axis=1)
                tap = src * mask_ref[k:k + 1, :]            # zero outside image
            patch_ref[k * W1:(k + 1) * W1, :] = tap
            k += 1
    o2 = jnp.dot(w2_ref[...], patch_ref[...].astype(jnp.bfloat16),
                 preferred_element_type=jnp.float32)        # (W1, HW)
    o2 = jnp.maximum(o2 + b2_ref[...], 0.0)

    # --- stage 3: 1x1 conv (BN3 scale folded into w3) + bias ----------------
    o3 = jnp.dot(w3_ref[...], o2.astype(jnp.bfloat16),
                 preferred_element_type=jnp.float32)        # (Cout, HW)
    o3 = o3 + b3_ref[...]

    # --- residual add (identity path, Cin == Cout) + final ReLU -------------
    out_ref[0] = jnp.maximum(o3 + x, 0.0)                   # lane-dense store


# ----------------------------------------------------------------------------
# Wrapper: NCHW in/out, BN folding into weights, pallas_call plumbing.
# ----------------------------------------------------------------------------
def bottleneck_pallas(x_nchw, params):
    N, Cin, H, W = x_nchw.shape
    w1, w2, w3 = params["w1"], params["w2"], params["w3"]   # OIHW
    W1 = w1.shape[0]
    Cout = w3.shape[0]
    HW = H * W
    eps = 1e-5
    # Identity residual (downsample=None) requires inplanes == planes*expansion.
    assert Cin == Cout, "downsample path not implemented (needs Cin == Cout)"

    def fold_bn(gamma, beta, mean, var):
        scale = gamma / jnp.sqrt(var + eps)
        bias = beta - mean * scale
        return scale.astype(jnp.float32), bias.astype(jnp.float32)

    s1, b1 = fold_bn(*params["bn1"])
    s2, b2 = fold_bn(*params["bn2"])
    s3, b3 = fold_bn(*params["bn3"])

    # Fold BN scale into the conv weights; arrange for left-multiplication in
    # channel-major (C, H*W) layout; bf16 operands for the MXU.
    w1f = (w1[:, :, 0, 0] * s1[:, None]).astype(jnp.bfloat16)            # (W1, Cin)
    w2f = jnp.transpose(w2 * s2[:, None, None, None], (0, 2, 3, 1))      # (O, kh, kw, I)
    w2f = w2f.reshape(W1, 9 * W1).astype(jnp.bfloat16)                   # (W1, 9*W1)
    w3f = (w3[:, :, 0, 0] * s3[:, None]).astype(jnp.bfloat16)            # (Cout, W1)

    b1c = b1.reshape(W1, 1)
    b2c = b2.reshape(W1, 1)
    b3c = b3.reshape(Cout, 1)

    # Precomputed f32 border masks (9, HW) for the shifted 3x3 taps, so the
    # kernel needs no integer div/mod or compares.
    p = jnp.arange(HW, dtype=jnp.int32)
    hh, ww = p // W, p % W
    masks = []
    for dh in (-1, 0, 1):
        for dw in (-1, 0, 1):
            valid = ((hh + dh >= 0) & (hh + dh < H) &
                     (ww + dw >= 0) & (ww + dw < W))
            masks.append(valid.astype(jnp.float32))
    mask = jnp.stack(masks, axis=0)                                      # (9, HW)

    x_flat = x_nchw.reshape(N, Cin, HW).astype(jnp.float32)              # lane-dense

    def full2d(a):
        return pl.BlockSpec(a.shape, lambda n: (0, 0))

    out_flat = pl.pallas_call(
        functools.partial(_bottleneck_kernel, H, W),
        out_shape=jax.ShapeDtypeStruct((N, Cout, HW), jnp.float32),
        grid_spec=pltpu.PrefetchScalarGridSpec(
            num_scalar_prefetch=0,
            grid=(N,),
            in_specs=[
                pl.BlockSpec((1, Cin, HW), lambda n: (n, 0, 0)),
                full2d(mask),
                full2d(w1f), full2d(b1c),
                full2d(w2f), full2d(b2c),
                full2d(w3f), full2d(b3c),
            ],
            out_specs=pl.BlockSpec((1, Cout, HW), lambda n: (n, 0, 0)),
            scratch_shapes=[pltpu.VMEM((9 * W1, HW), jnp.float32)],
        ),
        compiler_params=pltpu.CompilerParams(
            dimension_semantics=("parallel",)),
    )(x_flat, mask, w1f, b1c, w2f, b2c, w3f, b3c)

    return out_flat.reshape(N, Cout, H, W)


# ----------------------------------------------------------------------------
# Pure-JAX f32 reference (lax convs, NCHW / OIHW exactly like PyTorch).
# ----------------------------------------------------------------------------
def bottleneck_ref(x, params):
    eps = 1e-5

    def bn(y, bnp):
        gamma, beta, mean, var = bnp
        scale = (gamma / jnp.sqrt(var + eps)).reshape(1, -1, 1, 1)
        bias = (beta - mean * gamma / jnp.sqrt(var + eps)).reshape(1, -1, 1, 1)
        return y * scale + bias

    conv = functools.partial(
        lax.conv_general_dilated,
        dimension_numbers=("NCHW", "OIHW", "NCHW"))

    out = conv(x, params["w1"], window_strides=(1, 1), padding="VALID")
    out = jax.nn.relu(bn(out, params["bn1"]))
    out = conv(out, params["w2"], window_strides=(1, 1), padding=((1, 1), (1, 1)))
    out = jax.nn.relu(bn(out, params["bn2"]))
    out = conv(out, params["w3"], window_strides=(1, 1), padding="VALID")
    out = bn(out, params["bn3"])
    return jax.nn.relu(out + x)


# ----------------------------------------------------------------------------
if __name__ == "__main__":
    # Bottleneck(inplanes=16, planes=4): width=4, out channels = planes*4 = 16,
    # stride=1, downsample=None -> identity residual path.
    N, inplanes, planes, H, W = 2, 16, 4, 16, 16
    width = planes          # base_width=64, groups=1
    cout = planes * 4       # expansion = 4

    key = jax.random.PRNGKey(0)
    keys = jax.random.split(key, 16)

    x = jax.random.normal(keys[0], (N, inplanes, H, W), jnp.float32)

    def make_bn(k, c):
        k1, k2, k3, k4 = jax.random.split(k, 4)
        gamma = jax.random.uniform(k1, (c,), jnp.float32, 0.5, 1.5)
        beta = jax.random.normal(k2, (c,), jnp.float32) * 0.1
        mean = jax.random.normal(k3, (c,), jnp.float32) * 0.1
        var = jax.random.uniform(k4, (c,), jnp.float32, 0.5, 1.5)
        return (gamma, beta, mean, var)

    params = {
        "w1": jax.random.normal(keys[1], (width, inplanes, 1, 1), jnp.float32) * 0.2,
        "w2": jax.random.normal(keys[2], (width, width, 3, 3), jnp.float32) * 0.2,
        "w3": jax.random.normal(keys[3], (cout, width, 1, 1), jnp.float32) * 0.2,
        "bn1": make_bn(keys[4], width),
        "bn2": make_bn(keys[5], width),
        "bn3": make_bn(keys[6], cout),
    }

    out = jax.block_until_ready(bottleneck_pallas(x, params))
    ref = jax.block_until_ready(bottleneck_ref(x, params))

    assert out.shape == (N, cout, H, W), out.shape
    # Tolerance accounts for bf16 MXU operands (accumulation in f32).
    max_err = float(jnp.max(jnp.abs(out - ref)))
    assert jnp.allclose(out, ref, rtol=2e-2, atol=2e-2), max_err

    print("KERNEL_OK")
</pallas_src>

<mosaic_0001>
module attributes {stable_mosaic.version = 11 : i64} {
  func.func @_bottleneck_kernel(%arg0: i32, %arg1: memref<1x16x256xf32, #tpu.memory_space<vmem>>, %arg2: memref<9x256xf32, #tpu.memory_space<vmem>>, %arg3: memref<4x16xbf16, #tpu.memory_space<vmem>>, %arg4: memref<4x1xf32, #tpu.memory_space<vmem>>, %arg5: memref<4x36xbf16, #tpu.memory_space<vmem>>, %arg6: memref<4x1xf32, #tpu.memory_space<vmem>>, %arg7: memref<16x4xbf16, #tpu.memory_space<vmem>>, %arg8: memref<16x1xf32, #tpu.memory_space<vmem>>, %arg9: memref<1x16x256xf32, #tpu.memory_space<vmem>>, %arg10: memref<36x256xf32, #tpu.memory_space<vmem>>) attributes {dimension_semantics = [#tpu.dimension_semantics<parallel>], iteration_bounds = array<i64: 2>, scalar_prefetch = 0 : i64, scratch_operands = 1 : i64, tpu.core_type = #tpu.core_type<tc>, window_params = [{transform_indices = @transform_0, window_bounds = array<i64: 1, 16, 256>}, {pipeline_mode = #tpu.pipeline_mode<synchronous>, transform_indices = @transform_1, window_bounds = array<i64: 9, 256>}, {pipeline_mode = #tpu.pipeline_mode<synchronous>, transform_indices = @transform_2, window_bounds = array<i64: 4, 16>}, {pipeline_mode = #tpu.pipeline_mode<synchronous>, transform_indices = @transform_3, window_bounds = array<i64: 4, 1>}, {pipeline_mode = #tpu.pipeline_mode<synchronous>, transform_indices = @transform_4, window_bounds = array<i64: 4, 36>}, {pipeline_mode = #tpu.pipeline_mode<synchronous>, transform_indices = @transform_5, window_bounds = array<i64: 4, 1>}, {pipeline_mode = #tpu.pipeline_mode<synchronous>, transform_indices = @transform_6, window_bounds = array<i64: 16, 4>}, {pipeline_mode = #tpu.pipeline_mode<synchronous>, transform_indices = @transform_7, window_bounds = array<i64: 16, 1>}, {transform_indices = @transform_8, window_bounds = array<i64: 1, 16, 256>}]} {
    %c0 = arith.constant 0 : index
    %c0_0 = arith.constant 0 : index
    %c0_1 = arith.constant 0 : index
    %0 = vector.load %arg1[%c0, %c0_0, %c0_1] : memref<1x16x256xf32, #tpu.memory_space<vmem>>, vector<1x16x256xf32>
    %1 = vector.shape_cast %0 : vector<1x16x256xf32> to vector<16x256xf32>
    %c0_2 = arith.constant 0 : index
    %c0_3 = arith.constant 0 : index
    %2 = vector.load %arg3[%c0_2, %c0_3] : memref<4x16xbf16, #tpu.memory_space<vmem>>, vector<4x16xbf16>
    %3 = arith.truncf %1 : vector<16x256xf32> to vector<16x256xbf16>
    %cst = arith.constant dense<0.000000e+00> : vector<4x256xf32>
    %4 = tpu.matmul %2, %3, %cst {dimension_numbers = #tpu.dot_dimension_numbers<[1], [0], [0], [1], [0, 0, 1, 1], [], []>} : vector<4x16xbf16>, vector<16x256xbf16>, vector<4x256xf32> -> vector<4x256xf32>
    %c0_4 = arith.constant 0 : index
    %c0_5 = arith.constant 0 : index
    %5 = vector.load %arg4[%c0_4, %c0_5] : memref<4x1xf32, #tpu.memory_space<vmem>>, vector<4x1xf32>
    %6 = vector.broadcast %5 : vector<4x1xf32> to vector<4x256xf32>
    %7 = arith.addf %4, %6 : vector<4x256xf32>
    %cst_6 = arith.constant 0.000000e+00 : f32
    %8 = vector.broadcast %cst_6 : f32 to vector<4x256xf32>
    %9 = arith.maximumf %7, %8 : vector<4x256xf32>
    %c17_i32 = arith.constant 17 : i32
    %10 = tpu.dynamic_rotate %9 by %c17_i32 dim 1 : vector<4x256xf32>, i32 -> vector<4x256xf32>
    %c0_7 = arith.constant 0 : index
    %c0_8 = arith.constant 0 : index
    %11 = vector.load %arg2[%c0_7, %c0_8] : memref<9x256xf32, #tpu.memory_space<vmem>>, vector<1x256xf32>
    %12 = vector.broadcast %11 : vector<1x256xf32> to vector<4x256xf32>
    %13 = arith.mulf %10, %12 : vector<4x256xf32>
    %c0_9 = arith.constant 0 : index
    %c0_10 = arith.constant 0 : index
    %14 = vector.load %arg10[%c0_9, %c0_10] : memref<36x256xf32, #tpu.memory_space<vmem>>, vector<4x256xf32>
    tpu.vector_store %arg10[%c0_9, %c0_10], %13 {strides = array<i32>} : memref<36x256xf32, #tpu.memory_space<vmem>>, vector<4x256xf32>,
    %c16_i32 = arith.constant 16 : i32
    %15 = tpu.dynamic_rotate %9 by %c16_i32 dim 1 : vector<4x256xf32>, i32 -> vector<4x256xf32>
    %c1 = arith.constant 1 : index
    %c0_11 = arith.constant 0 : index
    %16 = vector.load %arg2[%c1, %c0_11] : memref<9x256xf32, #tpu.memory_space<vmem>>, vector<1x256xf32>
    %17 = vector.broadcast %16 : vector<1x256xf32> to vector<4x256xf32>
    %18 = arith.mulf %15, %17 : vector<4x256xf32>
    %c4 = arith.constant 4 : index
    %c0_12 = arith.constant 0 : index
    %19 = vector.load %arg10[%c4, %c0_12] : memref<36x256xf32, #tpu.memory_space<vmem>>, vector<4x256xf32>
    tpu.vector_store %arg10[%c4, %c0_12], %18 {strides = array<i32>} : memref<36x256xf32, #tpu.memory_space<vmem>>, vector<4x256xf32>,
    %c15_i32 = arith.constant 15 : i32
    %20 = tpu.dynamic_rotate %9 by %c15_i32 dim 1 : vector<4x256xf32>, i32 -> vector<4x256xf32>
    %c2 = arith.constant 2 : index
    %c0_13 = arith.constant 0 : index
    %21 = vector.load %arg2[%c2, %c0_13] : memref<9x256xf32, #tpu.memory_space<vmem>>, vector<1x256xf32>
    %22 = vector.broadcast %21 : vector<1x256xf32> to vector<4x256xf32>
    %23 = arith.mulf %20, %22 : vector<4x256xf32>
    %c8 = arith.constant 8 : index
    %c0_14 = arith.constant 0 : index
    %24 = vector.load %arg10[%c8, %c0_14] : memref<36x256xf32, #tpu.memory_space<vmem>>, vector<4x256xf32>
    tpu.vector_store %arg10[%c8, %c0_14], %23 {strides = array<i32>} : memref<36x256xf32, #tpu.memory_space<vmem>>, vector<4x256xf32>,
    %c1_i32 = arith.constant 1 : i32
    %25 = tpu.dynamic_rotate %9 by %c1_i32 dim 1 : vector<4x256xf32>, i32 -> vector<4x256xf32>
    %c3 = arith.constant 3 : index
    %c0_15 = arith.constant 0 : index
    %26 = vector.load %arg2[%c3, %c0_15] : memref<9x256xf32, #tpu.memory_space<vmem>>, vector<1x256xf32>
    %27 = vector.broadcast %26 : vector<1x256xf32> to vector<4x256xf32>
    %28 = arith.mulf %25, %27 : vector<4x256xf32>
    %c12 = arith.constant 12 : index
    %c0_16 = arith.constant 0 : index
    %29 = vector.load %arg10[%c12, %c0_16] : memref<36x256xf32, #tpu.memory_space<vmem>>, vector<4x256xf32>
    tpu.vector_store %arg10[%c12, %c0_16], %28 {strides = array<i32>} : memref<36x256xf32, #tpu.memory_space<vmem>>, vector<4x256xf32>,
    %c16 = arith.constant 16 : index
    %c0_17 = arith.constant 0 : index
    %30 = vector.load %arg10[%c16, %c0_17] : memref<36x256xf32, #tpu.memory_space<vmem>>, vector<4x256xf32>
    tpu.vector_store %arg10[%c16, %c0_17], %9 {strides = array<i32>} : memref<36x256xf32, #tpu.memory_space<vmem>>, vector<4x256xf32>,
    %c255_i32 = arith.constant 255 : i32
    %31 = tpu.dynamic_rotate %9 by %c255_i32 dim 1 : vector<4x256xf32>, i32 -> vector<4x256xf32>
    %c5 = arith.constant 5 : index
    %c0_18 = arith.constant 0 : index
    %32 = vector.load %arg2[%c5, %c0_18] : memref<9x256xf32, #tpu.memory_space<vmem>>, vector<1x256xf32>
    %33 = vector.broadcast %32 : vector<1x256xf32> to vector<4x256xf32>
    %34 = arith.mulf %31, %33 : vector<4x256xf32>
    %c20 = arith.constant 20 : index
    %c0_19 = arith.constant 0 : index
    %35 = vector.load %arg10[%c20, %c0_19] : memref<36x256xf32, #tpu.memory_space<vmem>>, vector<4x256xf32>
    tpu.vector_store %arg10[%c20, %c0_19], %34 {strides = array<i32>} : memref<36x256xf32, #tpu.memory_space<vmem>>, vector<4x256xf32>,
    %c241_i32 = arith.constant 241 : i32
    %36 = tpu.dynamic_rotate %9 by %c241_i32 dim 1 : vector<4x256xf32>, i32 -> vector<4x256xf32>
    %c6 = arith.constant 6 : index
    %c0_20 = arith.constant 0 : index
    %37 = vector.load %arg2[%c6, %c0_20] : memref<9x256xf32, #tpu.memory_space<vmem>>, vector<1x256xf32>
    %38 = vector.broadcast %37 : vector<1x256xf32> to vector<4x256xf32>
    %39 = arith.mulf %36, %38 : vector<4x256xf32>
    %c24 = arith.constant 24 : index
    %c0_21 = arith.constant 0 : index
    %40 = vector.load %arg10[%c24, %c0_21] : memref<36x256xf32, #tpu.memory_space<vmem>>, vector<4x256xf32>
    tpu.vector_store %arg10[%c24, %c0_21], %39 {strides = array<i32>} : memref<36x256xf32, #tpu.memory_space<vmem>>, vector<4x256xf32>,
    %c240_i32 = arith.constant 240 : i32
    %41 = tpu.dynamic_rotate %9 by %c240_i32 dim 1 : vector<4x256xf32>, i32 -> vector<4x256xf32>
    %c7 = arith.constant 7 : index
    %c0_22 = arith.constant 0 : index
    %42 = vector.load %arg2[%c7, %c0_22] : memref<9x256xf32, #tpu.memory_space<vmem>>, vector<1x256xf32>
    %43 = vector.broadcast %42 : vector<1x256xf32> to vector<4x256xf32>
    %44 = arith.mulf %41, %43 : vector<4x256xf32>
    %c28 = arith.constant 28 : index
    %c0_23 = arith.constant 0 : index
    %45 = vector.load %arg10[%c28, %c0_23] : memref<36x256xf32, #tpu.memory_space<vmem>>, vector<4x256xf32>
    tpu.vector_store %arg10[%c28, %c0_23], %44 {strides = array<i32>} : memref<36x256xf32, #tpu.memory_space<vmem>>, vector<4x256xf32>,
    %c239_i32 = arith.constant 239 : i32
    %46 = tpu.dynamic_rotate %9 by %c239_i32 dim 1 : vector<4x256xf32>, i32 -> vector<4x256xf32>
    %c8_24 = arith.constant 8 : index
    %c0_25 = arith.constant 0 : index
    %47 = vector.load %arg2[%c8_24, %c0_25] : memref<9x256xf32, #tpu.memory_space<vmem>>, vector<1x256xf32>
    %48 = vector.broadcast %47 : vector<1x256xf32> to vector<4x256xf32>
    %49 = arith.mulf %46, %48 : vector<4x256xf32>
    %c32 = arith.constant 32 : index
    %c0_26 = arith.constant 0 : index
    %50 = vector.load %arg10[%c32, %c0_26] : memref<36x256xf32, #tpu.memory_space<vmem>>, vector<4x256xf32>
    tpu.vector_store %arg10[%c32, %c0_26], %49 {strides = array<i32>} : memref<36x256xf32, #tpu.memory_space<vmem>>, vector<4x256xf32>,
    %c0_27 = arith.constant 0 : index
    %c0_28 = arith.constant 0 : index
    %51 = vector.load %arg5[%c0_27, %c0_28] : memref<4x36xbf16, #tpu.memory_space<vmem>>, vector<4x36xbf16>
    %c0_29 = arith.constant 0 : index
    %c0_30 = arith.constant 0 : index
    %52 = vector.load %arg10[%c0_29, %c0_30] : memref<36x256xf32, #tpu.memory_space<vmem>>, vector<36x256xf32>
    %53 = arith.truncf %52 : vector<36x256xf32> to vector<36x256xbf16>
    %cst_31 = arith.constant dense<0.000000e+00> : vector<4x256xf32>
    %54 = tpu.matmul %51, %53, %cst_31 {dimension_numbers = #tpu.dot_dimension_numbers<[1], [0], [0], [1], [0, 0, 1, 1], [], []>} : vector<4x36xbf16>, vector<36x256xbf16>, vector<4x256xf32> -> vector<4x256xf32>
    %c0_32 = arith.constant 0 : index
    %c0_33 = arith.constant 0 : index
    %55 = vector.load %arg6[%c0_32, %c0_33] : memref<4x1xf32, #tpu.memory_space<vmem>>, vector<4x1xf32>
    %56 = vector.broadcast %55 : vector<4x1xf32> to vector<4x256xf32>
    %57 = arith.addf %54, %56 : vector<4x256xf32>
    %cst_34 = arith.constant 0.000000e+00 : f32
    %58 = vector.broadcast %cst_34 : f32 to vector<4x256xf32>
    %59 = arith.maximumf %57, %58 : vector<4x256xf32>
    %c0_35 = arith.constant 0 : index
    %c0_36 = arith.constant 0 : index
    %60 = vector.load %arg7[%c0_35, %c0_36] : memref<16x4xbf16, #tpu.memory_space<vmem>>, vector<16x4xbf16>
    %61 = arith.truncf %59 : vector<4x256xf32> to vector<4x256xbf16>
    %cst_37 = arith.constant dense<0.000000e+00> : vector<16x256xf32>
    %62 = tpu.matmul %60, %61, %cst_37 {dimension_numbers = #tpu.dot_dimension_numbers<[1], [0], [0], [1], [0, 0, 1, 1], [], []>} : vector<16x4xbf16>, vector<4x256xbf16>, vector<16x256xf32> -> vector<16x256xf32>
    %c0_38 = arith.constant 0 : index
    %c0_39 = arith.constant 0 : index
    %63 = vector.load %arg8[%c0_38, %c0_39] : memref<16x1xf32, #tpu.memory_space<vmem>>, vector<16x1xf32>
    %64 = vector.broadcast %63 : vector<16x1xf32> to vector<16x256xf32>
    %65 = arith.addf %62, %64 : vector<16x256xf32>
    %66 = arith.addf %65, %1 : vector<16x256xf32>
    %cst_40 = arith.constant 0.000000e+00 : f32
    %67 = vector.broadcast %cst_40 : f32 to vector<16x256xf32>
    %68 = arith.maximumf %66, %67 : vector<16x256xf32>
    %c0_41 = arith.constant 0 : index
    %c0_42 = arith.constant 0 : index
    %c0_43 = arith.constant 0 : index
    %69 = vector.load %arg9[%c0_41, %c0_42, %c0_43] : memref<1x16x256xf32, #tpu.memory_space<vmem>>, vector<1x16x256xf32>
    %70 = vector.shape_cast %69 : vector<1x16x256xf32> to vector<16x256xf32>
    %71 = vector.shape_cast %68 : vector<16x256xf32> to vector<1x16x256xf32>
    tpu.vector_store %arg9[%c0_41, %c0_42, %c0_43], %71 {strides = array<i32>} : memref<1x16x256xf32, #tpu.memory_space<vmem>>, vector<1x16x256xf32>,
    return
  }
  func.func @transform_0(%arg0: i32) -> (i32, i32, i32) {
    %c0_i32 = arith.constant 0 : i32
    %c0_i32_0 = arith.constant 0 : i32
    %c0_i32_1 = arith.constant 0 : i32
    return %arg0, %c0_i32, %c0_i32_0 : i32, i32, i32
  }
  func.func @transform_1(%arg0: i32) -> (i32, i32) {
    %c0_i32 = arith.constant 0 : i32
    %c0_i32_0 = arith.constant 0 : i32
    %c0_i32_1 = arith.constant 0 : i32
    return %c0_i32, %c0_i32_0 : i32, i32
  }
  func.func @transform_2(%arg0: i32) -> (i32, i32) {
    %c0_i32 = arith.constant 0 : i32
    %c0_i32_0 = arith.constant 0 : i32
    %c0_i32_1 = arith.constant 0 : i32
    return %c0_i32, %c0_i32_0 : i32, i32
  }
  func.func @transform_3(%arg0: i32) -> (i32, i32) {
    %c0_i32 = arith.constant 0 : i32
    %c0_i32_0 = arith.constant 0 : i32
    %c0_i32_1 = arith.constant 0 : i32
    return %c0_i32, %c0_i32_0 : i32, i32
  }
  func.func @transform_4(%arg0: i32) -> (i32, i32) {
    %c0_i32 = arith.constant 0 : i32
    %c0_i32_0 = arith.constant 0 : i32
    %c0_i32_1 = arith.constant 0 : i32
    return %c0_i32, %c0_i32_0 : i32, i32
  }
  func.func @transform_5(%arg0: i32) -> (i32, i32) {
    %c0_i32 = arith.constant 0 : i32
    %c0_i32_0 = arith.constant 0 : i32
    %c0_i32_1 = arith.constant 0 : i32
    return %c0_i32, %c0_i32_0 : i32, i32
  }
  func.func @transform_6(%arg0: i32) -> (i32, i32) {
    %c0_i32 = arith.constant 0 : i32
    %c0_i32_0 = arith.constant 0 : i32
    %c0_i32_1 = arith.constant 0 : i32
    return %c0_i32, %c0_i32_0 : i32, i32
  }
  func.func @transform_7(%arg0: i32) -> (i32, i32) {
    %c0_i32 = arith.constant 0 : i32
    %c0_i32_0 = arith.constant 0 : i32
    %c0_i32_1 = arith.constant 0 : i32
    return %c0_i32, %c0_i32_0 : i32, i32
  }
  func.func @transform_8(%arg0: i32) -> (i32, i32, i32) {
    %c0_i32 = arith.constant 0 : i32
    %c0_i32_0 = arith.constant 0 : i32
    %c0_i32_1 = arith.constant 0 : i32
    return %arg0, %c0_i32, %c0_i32_0 : i32, i32, i32
  }
}

</mosaic_0001>

<llo_original>
// kernel: tpu_custom_call.1
$region0: #{tpu_custom_call.1}
  #allocation0 [shape = 'u32[]', space=smem, size = 0x4, offset = 0x4, fixed_abs, tag = 'smem constant byte address 0x4 - core index']
  #allocation1 [shape = 'u32[144,128]{1,0:T(1,128)}', space=vmem, size = 0x12000, scoped, tag = 'internal scratch']
  #allocation2 [shape = 'f32[36,256]{1,0:T(8,128)}', space=vmem, size = 0xa000, scoped, tag = 'scratch operand']
  %s0 = inlined_call_operand.hbm [shape: f32[2,16,256], index: 0, kind: input, shape index: {}]
  %s1 = inlined_call_operand.vmem [shape: f32[9,256], index: 1, kind: input, shape index: {}]
  %s2 = inlined_call_operand.vmem [shape: bf16[4,16], index: 2, kind: input, shape index: {}]
  %s3 = inlined_call_operand.vmem [shape: f32[4,1], index: 3, kind: input, shape index: {}]
  %s4 = inlined_call_operand.vmem [shape: bf16[4,36], index: 4, kind: input, shape index: {}]
  %s5 = inlined_call_operand.vmem [shape: f32[4,1], index: 5, kind: input, shape index: {}]
  %s6 = inlined_call_operand.vmem [shape: bf16[16,4], index: 6, kind: input, shape index: {}]
  %s7 = inlined_call_operand.vmem [shape: f32[16,1], index: 7, kind: input, shape index: {}]
  %s8 = inlined_call_operand.hbm [shape: f32[2,16,256], index: 8, kind: output, shape index: {}]
  %s9 = sld [smem:[#allocation0]]
  $region69: #{tpu_custom_call.1} parent=0
    _
  %s11 = ssub.s32 1, %s9
  %s12 = scalar_select 0, %s11, %s9
  $region1: #{tpu_custom_call.1} parent=0
    #allocation3 [shape = 'u8[32768]{0}', space=vmem, size = 0x8000, scoped, tag = 'input window, operand 0']
    #allocation4 [shape = 's32[2]{0}', space=sflag, size = 0x8, scoped, tag = 'scoped memory for tpu_custom_call.1']
    #allocation5 [shape = 's32[2]{0}', space=sflag, size = 0x8, scoped, tag = 'scoped memory for tpu_custom_call.1']
    #allocation6 [shape = 'u8[32768]{0}', space=vmem, size = 0x8000, scoped, tag = 'output window, operand 0']
    %13 = vsyncpa [#allocation4], 0
    %s14 = scalar_lea.sflag [#allocation4], 1
    %15 = vsyncpa %s14, 0
    %16 = vsyncpa [#allocation5], 0
    %s17 = scalar_lea.sflag [#allocation5], 1
    %18 = vsyncpa %s17, 0
    loop: start=0, step=1, limit=4
    $region2: #{tpu_custom_call.1} parent=1 // loop_pre_header
      _
    $region3: #{tpu_custom_call.1} parent=1 // loop_header
      %s20 = sphi 0, %s24
      %p21 = scmp.ge.s32.totalorder %s20, 4
      %s30 = sphi 0, %s32
      %s33 = sphi 0, %s30
      %s34 = sphi 0, %s33
      %s50 = sphi 0, %s34
      %s54 = sphi 0, %s54
      %s56 = sphi 0, %s54
      %s57 = sphi 0, %s56
      %s71 = sphi 0, %s57
      %s75 = sphi 0, %s75
      %s77 = sphi 0, %s75
      %s78 = sphi 0, %s77
      %s92 = sphi 0, %s78
      %s96 = sphi 0, %s96
      %s98 = sphi 0, %s96
      %s99 = sphi 0, %s98
      %s113 = sphi 0, %s99
      %s117 = sphi 0, %s117
      %s119 = sphi 0, %s117
      %s120 = sphi 0, %s119
      %s134 = sphi 0, %s120
      %s138 = sphi 0, %s138
      %s140 = sphi 0, %s138
      %s141 = sphi 0, %s140
      %s155 = sphi 0, %s141
      %s159 = sphi 0, %s159
      %s161 = sphi 0, %s159
      %s162 = sphi 0, %s161
      %s176 = sphi 0, %s162
      %s180 = sphi 0, %s180
      %s182 = sphi 0, %s180
      %s183 = sphi 0, %s182
      %s197 = sphi 0, %s183
      %s203 = sphi 0, %s205
      %s206 = sphi 0, %s203
      %s207 = sphi 0, %s206
      %s223 = sphi 0, %s207
    $region4: #{tpu_custom_call.1} parent=1 // loop_header_branch
      %23 = sbr.rel (%p21) target = $region8
    $region5: #{tpu_custom_call.1} parent=1 // loop_body
      %s25 = ssub.s32 %s20, 1
      %s26 = ssub.s32 %s20, 2
      %s27 = sadd.s32 %s20, 1
      %s28 = ssub.s32 %s20, %s27
      %p29 = scmp.eq.s32.totalorder %s28, 0
      %s31 = sadd.s32 %s30, 1
      %s32 = scalar_select %p29, %s30, %s31
      %p35 = pneg %p29
      %p36 = scmp.eq.s32.totalorder %s20, 1
      %p37 = por %p35, %p36
      %p38 = scmp.ne.s32.totalorder %s30, %s33
      %p39 = scmp.eq.s32.totalorder %s20, 0
      %p40 = por %p38, %p39
      %p41 = scmp.ne.s32.totalorder %s30, %s33
      %p42 = scmp.eq.s32.totalorder %s25, 1
      %p43 = por %p41, %p42
      %p44 = scmp.ne.s32.totalorder %s33, %s34
      %p45 = scmp.eq.s32.totalorder %s25, 0
      %p46 = por %p44, %p45
      %p47 = scmp.ne.s32.totalorder %s33, %s34
      %p48 = scmp.eq.s32.totalorder %s26, 1
      %p49 = por %p47, %p48
      %p51 = scmp.ne.s32.totalorder %s34, %s50
      %p52 = scmp.eq.s32.totalorder %s26, 0
      %p53 = por %p51, %p52
      %s55 = sadd.s32 %s54, 1
      %p58 = scmp.eq.s32.totalorder %s20, 1
      %p59 = scmp.ne.s32.totalorder %s54, %s56
      %p60 = scmp.eq.s32.totalorder %s20, 0
      %p61 = por %p59, %p60
      %p62 = scmp.ne.s32.totalorder %s54, %s56
      %p63 = scmp.eq.s32.totalorder %s25, 1
      %p64 = por %p62, %p63
      %p65 = scmp.ne.s32.totalorder %s56, %s57
      %p66 = scmp.eq.s32.totalorder %s25, 0
      %p67 = por %p65, %p66
      %p68 = scmp.ne.s32.totalorder %s56, %s57
      %p69 = scmp.eq.s32.totalorder %s26, 1
      %p70 = por %p68, %p69
      %p72 = scmp.ne.s32.totalorder %s57, %s71
      %p73 = scmp.eq.s32.totalorder %s26, 0
      %p74 = por %p72, %p73
      %s76 = sadd.s32 %s75, 1
      %p79 = scmp.eq.s32.totalorder %s20, 1
      %p80 = scmp.ne.s32.totalorder %s75, %s77
      %p81 = scmp.eq.s32.totalorder %s20, 0
      %p82 = por %p80, %p81
      %p83 = scmp.ne.s32.totalorder %s75, %s77
      %p84 = scmp.eq.s32.totalorder %s25, 1
      %p85 = por %p83, %p84
      %p86 = scmp.ne.s32.totalorder %s77, %s78
      %p87 = scmp.eq.s32.totalorder %s25, 0
      %p88 = por %p86, %p87
      %p89 = scmp.ne.s32.totalorder %s77, %s78
      %p90 = scmp.eq.s32.totalorder %s26, 1
      %p91 = por %p89, %p90
      %p93 = scmp.ne.s32.totalorder %s78, %s92
      %p94 = scmp.eq.s32.totalorder %s26, 0
      %p95 = por %p93, %p94
      %s97 = sadd.s32 %s96, 1
      %p100 = scmp.eq.s32.totalorder %s20, 1
      %p101 = scmp.ne.s32.totalorder %s96, %s98
      %p102 = scmp.eq.s32.totalorder %s20, 0
      %p103 = por %p101, %p102
      %p104 = scmp.ne.s32.totalorder %s96, %s98
      %p105 = scmp.eq.s32.totalorder %s25, 1
      %p106 = por %p104, %p105
      %p107 = scmp.ne.s32.totalorder %s98, %s99
      %p108 = scmp.eq.s32.totalorder %s25, 0
      %p109 = por %p107, %p108
      %p110 = scmp.ne.s32.totalorder %s98, %s99
      %p111 = scmp.eq.s32.totalorder %s26, 1
      %p112 = por %p110, %p111
      %p114 = scmp.ne.s32.totalorder %s99, %s113
      %p115 = scmp.eq.s32.totalorder %s26, 0
      %p116 = por %p114, %p115
      %s118 = sadd.s32 %s117, 1
      %p121 = scmp.eq.s32.totalorder %s20, 1
      %p122 = scmp.ne.s32.totalorder %s117, %s119
      %p123 = scmp.eq.s32.totalorder %s20, 0
      %p124 = por %p122, %p123
      %p125 = scmp.ne.s32.totalorder %s117, %s119
      %p126 = scmp.eq.s32.totalorder %s25, 1
      %p127 = por %p125, %p126
      %p128 = scmp.ne.s32.totalorder %s119, %s120
      %p129 = scmp.eq.s32.totalorder %s25, 0
      %p130 = por %p128, %p129
      %p131 = scmp.ne.s32.totalorder %s119, %s120
      %p132 = scmp.eq.s32.totalorder %s26, 1
      %p133 = por %p131, %p132
      %p135 = scmp.ne.s32.totalorder %s120, %s134
      %p136 = scmp.eq.s32.totalorder %s26, 0
      %p137 = por %p135, %p136
      %s139 = sadd.s32 %s138, 1
      %p142 = scmp.eq.s32.totalorder %s20, 1
      %p143 = scmp.ne.s32.totalorder %s138, %s140
      %p144 = scmp.eq.s32.totalorder %s20, 0
      %p145 = por %p143, %p144
      %p146 = scmp.ne.s32.totalorder %s138, %s140
      %p147 = scmp.eq.s32.totalorder %s25, 1
      %p148 = por %p146, %p147
      %p149 = scmp.ne.s32.totalorder %s140, %s141
      %p150 = scmp.eq.s32.totalorder %s25, 0
      %p151 = por %p149, %p150
      %p152 = scmp.ne.s32.totalorder %s140, %s141
      %p153 = scmp.eq.s32.totalorder %s26, 1
      %p154 = por %p152, %p153
      %p156 = scmp.ne.s32.totalorder %s141, %s155
      %p157 = scmp.eq.s32.totalorder %s26, 0
      %p158 = por %p156, %p157
      %s160 = sadd.s32 %s159, 1
      %p163 = scmp.eq.s32.totalorder %s20, 1
      %p164 = scmp.ne.s32.totalorder %s159, %s161
      %p165 = scmp.eq.s32.totalorder %s20, 0
      %p166 = por %p164, %p165
      %p167 = scmp.ne.s32.totalorder %s159, %s161
      %p168 = scmp.eq.s32.totalorder %s25, 1
      %p169 = por %p167, %p168
      %p170 = scmp.ne.s32.totalorder %s161, %s162
      %p171 = scmp.eq.s32.totalorder %s25, 0
      %p172 = por %p170, %p171
      %p173 = scmp.ne.s32.totalorder %s161, %s162
      %p174 = scmp.eq.s32.totalorder %s26, 1
      %p175 = por %p173, %p174
      %p177 = scmp.ne.s32.totalorder %s162, %s176
      %p178 = scmp.eq.s32.totalorder %s26, 0
      %p179 = por %p177, %p178
      %s181 = sadd.s32 %s180, 1
      %p184 = scmp.eq.s32.totalorder %s20, 1
      %p185 = scmp.ne.s32.totalorder %s180, %s182
      %p186 = scmp.eq.s32.totalorder %s20, 0
      %p187 = por %p185, %p186
      %p188 = scmp.ne.s32.totalorder %s180, %s182
      %p189 = scmp.eq.s32.totalorder %s25, 1
      %p190 = por %p188, %p189
      %p191 = scmp.ne.s32.totalorder %s182, %s183
      %p192 = scmp.eq.s32.totalorder %s25, 0
      %p193 = por %p191, %p192
      %p194 = scmp.ne.s32.totalorder %s182, %s183
      %p195 = scmp.eq.s32.totalorder %s26, 1
      %p196 = por %p194, %p195
      %p198 = scmp.ne.s32.totalorder %s183, %s197
      %p199 = scmp.eq.s32.totalorder %s26, 0
      %p200 = por %p198, %p199
      %s201 = ssub.s32 %s20, %s27
      %p202 = scmp.eq.s32.totalorder %s201, 0
      %s204 = sadd.s32 %s203, 1
      %s205 = scalar_select %p202, %s203, %s204
      %p208 = pneg %p202
      %p209 = scmp.eq.s32.totalorder %s20, 1
      %p210 = por %p208, %p209
      %p211 = scmp.ne.s32.totalorder %s203, %s206
      %p212 = scmp.eq.s32.totalorder %s20, 0
      %p213 = por %p211, %p212
      %p214 = scmp.ne.s32.totalorder %s203, %s206
      %p215 = scmp.eq.s32.totalorder %s25, 1
      %p216 = por %p214, %p215
      %p217 = scmp.ne.s32.totalorder %s206, %s207
      %p218 = scmp.eq.s32.totalorder %s25, 0
      %p219 = por %p217, %p218
      %p220 = scmp.ne.s32.totalorder %s206, %s207
      %p221 = scmp.eq.s32.totalorder %s26, 1
      %p222 = por %p220, %p221
      %p224 = scmp.ne.s32.totalorder %s207, %s223
      %p225 = scmp.eq.s32.totalorder %s26, 0
      %p226 = por %p224, %p225
      %p227 = scmp.le.s32.totalorder 1, %s20
      %p228 = scmp.lt.s32.totalorder %s20, 3
      %p229 = pnand %p227, %p228
      %p230 = pneg %p229
      // Predicated region
      $region9: #{tpu_custom_call.1} parent=5 // pred_check
        _
      $region10: #{tpu_custom_call.1} parent=5 // pred_check_branch
        %232 = sbr.rel (%p229) target = $region12
      $region11: #{tpu_custom_call.1} parent=5 // pred_region
        %s233 = ssub.s32 %s20, 1
        // Predicated region
        $region13: #{tpu_custom_call.1} parent=11 // pred_check
          %p234 = pneg %p67
        $region14: #{tpu_custom_call.1} parent=11 // pred_check_branch
          %236 = sbr.rel (%p234) target = $region16
        $region15: #{tpu_custom_call.1} parent=11 // pred_region
          _
        $region16: #{tpu_custom_call.1} parent=11 // pred_fallthru
          _
        // Predicated region
        $region17: #{tpu_custom_call.1} parent=11 // pred_check
          %p237 = pneg %p88
        $region18: #{tpu_custom_call.1} parent=11 // pred_check_branch
          %239 = sbr.rel (%p237) target = $region20
        $region19: #{tpu_custom_call.1} parent=11 // pred_region
          _
        $region20: #{tpu_custom_call.1} parent=11 // pred_fallthru
          _
        // Predicated region
        $region21: #{tpu_custom_call.1} parent=11 // pred_check
          %p240 = pneg %p109
        $region22: #{tpu_custom_call.1} parent=11 // pred_check_branch
          %242 = sbr.rel (%p240) target = $region24
        $region23: #{tpu_custom_call.1} parent=11 // pred_region
          _
        $region24: #{tpu_custom_call.1} parent=11 // pred_fallthru
          _
        // Predicated region
        $region25: #{tpu_custom_call.1} parent=11 // pred_check
          %p243 = pneg %p130
        $region26: #{tpu_custom_call.1} parent=11 // pred_check_branch
          %245 = sbr.rel (%p243) target = $region28
        $region27: #{tpu_custom_call.1} parent=11 // pred_region
          _
        $region28: #{tpu_custom_call.1} parent=11 // pred_fallthru
          _
        // Predicated region
        $region29: #{tpu_custom_call.1} parent=11 // pred_check
          %p246 = pneg %p151
        $region30: #{tpu_custom_call.1} parent=11 // pred_check_branch
          %248 = sbr.rel (%p246) target = $region32
        $region31: #{tpu_custom_call.1} parent=11 // pred_region
          _
        $region32: #{tpu_custom_call.1} parent=11 // pred_fallthru
          _
        // Predicated region
        $region33: #{tpu_custom_call.1} parent=11 // pred_check
          %p249 = pneg %p172
        $region34: #{tpu_custom_call.1} parent=11 // pred_check_branch
          %251 = sbr.rel (%p249) target = $region36
        $region35: #{tpu_custom_call.1} parent=11 // pred_region
          _
        $region36: #{tpu_custom_call.1} parent=11 // pred_fallthru
          _
        // Predicated region
        $region37: #{tpu_custom_call.1} parent=11 // pred_check
          %p252 = pneg %p193
        $region38: #{tpu_custom_call.1} parent=11 // pred_check_branch
          %254 = sbr.rel (%p252) target = $region40
        $region39: #{tpu_custom_call.1} parent=11 // pred_region
          _
        $region40: #{tpu_custom_call.1} parent=11 // pred_fallthru
          _
      $region12: #{tpu_custom_call.1} parent=5 // pred_fallthru
        _
      %p255 = scmp.lt.s32.totalorder %s20, 2
      // Predicated region
      $region41: #{tpu_custom_call.1} parent=5 // pred_check
        %p256 = pneg %p255
      $region42: #{tpu_custom_call.1} parent=5 // pred_check_branch
        %258 = sbr.rel (%p256) target = $region44
      $region43: #{tpu_custom_call.1} parent=5 // pred_region
        // Predicated region
        $region45: #{tpu_custom_call.1} parent=43 // pred_check
          %p259 = pneg %p40
        $region46: #{tpu_custom_call.1} parent=43 // pred_check_branch
          %261 = sbr.rel (%p259) target = $region48
        $region47: #{tpu_custom_call.1} parent=43 // pred_region
          %s262 = sand.u32 %s30, 1
          %s263 = scalar_lea.sflag [#allocation4], %s262
          %s264 = sand.u32 %s30, 1
          %s265 = smul.addr %s264, 32
          %s266 = scalar_lea.vmem [#allocation3], %s265
          %s268 = ssub.s32 512, 512
          %269 = vsyncadd %s263, %s268
          %s270 = smul.addr %s20, 4
          %s271 = smul.addr %s270, 128
          %s272 = scalar_lea.hbm %s0, %s271
          %s273 = sshll.u32 %s266, 4
          %s274 = int_to_ptr.vmem [resolvable:$true] %s273
          %279 = dma.hbm_to_vmem [thread:$0]  %s272, 512, %s274, %s263, 256, 256, 16
        $region48: #{tpu_custom_call.1} parent=43 // pred_fallthru
          _
      $region44: #{tpu_custom_call.1} parent=5 // pred_fallthru
        _
      %p280 = scmp.le.s32.totalorder 1, %s20
      %p281 = scmp.lt.s32.totalorder %s20, 3
      %p282 = pnand %p280, %p281
      %p283 = pneg %p282
      // Predicated region
      $region49: #{tpu_custom_call.1} parent=5 // pred_check
        _
      $region50: #{tpu_custom_call.1} parent=5 // pred_check_branch
        %285 = sbr.rel (%p282) target = $region52
      $region51: #{tpu_custom_call.1} parent=5 // pred_region
        %s286 = ssub.s32 %s20, 1
        %s287 = sand.u32 %s33, 1
        %s288 = scalar_lea.sflag [#allocation4], %s287
        %s289 = sand.u32 %s33, 1
        %s290 = smul.addr %s289, 32
        %s291 = scalar_lea.vmem [#allocation3], %s290
        // Predicated region
        $region53: #{tpu_custom_call.1} parent=51 // pred_check
          %p292 = pneg %p46
        $region54: #{tpu_custom_call.1} parent=51 // pred_check_branch
          %294 = sbr.rel (%p292) target = $region56
        $region55: #{tpu_custom_call.1} parent=51 // pred_region
          %295 = dma.done %s288, 512
        $region56: #{tpu_custom_call.1} parent=51 // pred_fallthru
          _
        %s296 = sand.u32 %s33, 1
        %s297 = scalar_lea.sflag [#allocation4], %s296
        %s298 = sand.u32 %s33, 1
        %s299 = smul.addr %s298, 32
        %s300 = scalar_lea.vmem [#allocation3], %s299
        %p301 = pneg %p46
        %p302 = pneg %p43
        %p303 = pneg %p67
        %p304 = pneg %p64
        %p305 = pneg %p88
        %p306 = pneg %p85
        %p307 = pneg %p109
        %p308 = pneg %p106
        %p309 = pneg %p130
        %p310 = pneg %p127
        %p311 = pneg %p151
        %p312 = pneg %p148
        %p313 = pneg %p172
        %p314 = pneg %p169
        %p315 = pneg %p193
        %p316 = pneg %p190
        %p317 = pneg %p219
        %p318 = pneg %p216
        %s319 = sand.u32 %s206, 1
        %s320 = scalar_lea.sflag [#allocation5], %s319
        %s321 = sand.u32 %s206, 1
        %s322 = smul.addr %s321, 32
        %s323 = scalar_lea.vmem [#allocation6], %s322
        %v325 = vld [vmem:[%s291] sm:$0xff]
        %v326 = vld [vmem:[%s291 + $0x8] sm:$0xff]
        %v327 = vld [vmem:[%s291 + $0x10] sm:$0xff]
        %v328 = vld [vmem:[%s291 + $0x18] sm:$0xff]
        %v329 = vld [vmem:[%s2] sm:$0x3]
        %v330 = vpack.c.bf16 %v327, %v325
        %v331 = vpack.c.bf16 %v328, %v326
        %v332 = vld [vmem:[%s3] sm:$0xf]
        %334 = vset.pattern.permute.xlu0 0
        %335 = vperm.xlu0 %334, %v332
        %v336 = vpop.permute.xlu0 %335
        %vm338 = vcmask 130048
        %v340 = vsel %vm338, %v329, 0
        %342 = vmatprep.subr.bf16.mxu0 %v331
        %343 = vmatpush1.bf16.msra.mxu0 %v330
        %344 = vmatprep.subr.bf16.mxu0 0
        %345 = vmatpush1.bf16.msra.mxu0 0
        %346 = vmatprep.subr.bf16.mxu0 0
        %347 = vmatpush1.bf16.msra.mxu0 0
        %348 = vmatprep.subr.bf16.mxu0 0
        %349 = vmatpush1.bf16.msra.mxu0 0
        %350 = vmatprep.subr.bf16.mxu0 0
        %351 = vmatpush1.bf16.msra.mxu0 0
        %352 = vmatprep.subr.bf16.mxu0 0
        %353 = vmatpush1.bf16.msra.mxu0 0
        %354 = vmatprep.subr.bf16.mxu0 0
        %355 = vmatpush1.bf16.msra.mxu0 0
        %356 = vmatprep.subr.bf16.mxu0 0
        %357 = vmatpush1.bf16.msra.mxu0 0
        %358 = vmatprep.subr.bf16.mxu0 0
        %359 = vmatpush1.bf16.msra.mxu0 0
        %360 = vmatprep.subr.bf16.mxu0 0
        %361 = vmatpush1.bf16.msra.mxu0 0
        %362 = vmatprep.subr.bf16.mxu0 0
        %363 = vmatpush1.bf16.msra.mxu0 0
        %364 = vmatprep.subr.bf16.mxu0 0
        %365 = vmatpush1.bf16.msra.mxu0 0
        %366 = vmatprep.subr.bf16.mxu0 0
        %367 = vmatpush1.bf16.msra.mxu0 0
        %368 = vmatprep.subr.bf16.mxu0 0
        %369 = vmatpush1.bf16.msra.mxu0 0
        %370 = vmatprep.subr.bf16.mxu0 0
        %371 = vmatpush1.bf16.msra.mxu0 0
        %372 = vmatprep.subr.bf16.mxu0 0
        %373 = vmatpush1.bf16.msra.mxu0 0
        %374 = vmatprep.mubr.bf16.mxu0 0
        %375 = vmatmul.mubr.bf16.gmra.mrb[0].mxu0 %v340
        %v376 = vpop.f32.mrb[0].mxu0
        %v377 = vadd.f32 %v336, %v376
        %v378 = vpop.f32.mrb[0].mxu0
        %v379 = vadd.f32 %v336, %v378
        %v380 = vpop.f32.mrb[0].mxu0
        %v381 = vpop.f32.mrb[0].mxu0
        %382 = vdwg.mxu0
        %v383 = vmax.f32 %v377, 0.0
        %v384 = vmax.f32 %v379, 0.0
        %385 = vrot.lane.b32.xlu0 %v383, 17
        %v386 = vpop.permute.xlu0 %385
        %387 = vrot.lane.b32.xlu0 %v384, 17
        %v388 = vpop.permute.xlu0 %387
        %v389 = vlaneseq
        %v390 = vand.u32 %v389, 127
        %vm391 = vcmp.lt.s32.totalorder %v390, 17
        %v392 = vsel %vm391, %v386, %v388
        %v393 = vsel %vm391, %v388, %v386
        %v394 = vld [vmem:[%s1] ss:$8 sm:$0x3]
        %v396 = vlaneseq
        %v397 = vshrl.u32 %v396, 7
        %v398 = vsub.s32 0, %v397
        %v399 = vrot.slane %v394, %v398
        %v400 = vlaneseq
        %v401 = vshrl.u32 %v400, 7
        %v402 = vsub.s32 1, %v401
        %v403 = vrot.slane %v394, %v402
        %v406 = vmul.f32 %v393, %v399
        %v407 = vmul.f32 %v392, %v403
        %408 = vst [vmem:[#allocation2] sm:$0xf] %v406
        %409 = vst [vmem:[#allocation2 + $0x8] sm:$0xf] %v407
        %410 = vrot.lane.b32.xlu0 %v383, 16
        %v411 = vpop.permute.xlu0 %410
        %412 = vrot.lane.b32.xlu0 %v384, 16
        %v413 = vpop.permute.xlu0 %412
        %vm414 = vcmp.lt.s32.totalorder %v390, 16
        %v415 = vsel %vm414, %v411, %v413
        %v416 = vsel %vm414, %v413, %v411
        %s417 = scalar_lea.vmem %s1, 1
        %v418 = vld [vmem:[%s417] ss:$8 sm:$0x3]
        %v420 = vlaneseq
        %v421 = vshrl.u32 %v420, 7
        %v422 = vsub.s32 0, %v421
        %v423 = vrot.slane %v418, %v422
        %v424 = vlaneseq
        %v425 = vshrl.u32 %v424, 7
        %v426 = vsub.s32 1, %v425
        %v427 = vrot.slane %v418, %v426
        %v430 = vmul.f32 %v416, %v423
        %v431 = vmul.f32 %v415, %v427
        %v434 = vrot.slane %v430, 4
        %v435 = vrot.slane %v431, 4
        %438 = vst [vmem:[#allocation2] sm:$0xf0] %v434
        %439 = vst [vmem:[#allocation2 + $0x8] sm:$0xf0] %v435
        %440 = vrot.lane.b32.xlu0 %v383, 15
        %v441 = vpop.permute.xlu0 %440
        %442 = vrot.lane.b32.xlu0 %v384, 15
        %v443 = vpop.permute.xlu0 %442
        %vm444 = vcmp.lt.s32.totalorder %v390, 15
        %v445 = vsel %vm444, %v441, %v443
        %v446 = vsel %vm444, %v443, %v441
        %s447 = scalar_lea.vmem %s1, 2
        %v448 = vld [vmem:[%s447] ss:$8 sm:$0x3]
        %v450 = vlaneseq
        %v451 = vshrl.u32 %v450, 7
        %v452 = vsub.s32 0, %v451
        %v453 = vrot.slane %v448, %v452
        %v454 = vlaneseq
        %v455 = vshrl.u32 %v454, 7
        %v456 = vsub.s32 1, %v455
        %v457 = vrot.slane %v448, %v456
        %v460 = vmul.f32 %v446, %v453
        %v461 = vmul.f32 %v445, %v457
        %462 = vst [vmem:[#allocation2 + $0x10] sm:$0xf] %v460
        %463 = vst [vmem:[#allocation2 + $0x18] sm:$0xf] %v461
        %464 = vrot.lane.b32.xlu0 %v383, 1
        %v465 = vpop.permute.xlu0 %464
        %466 = vrot.lane.b32.xlu0 %v384, 1
        %v467 = vpop.permute.xlu0 %466
        %vm468 = vcmp.lt.s32.totalorder %v390, 1
        %v469 = vsel %vm468, %v465, %v467
        %v470 = vsel %vm468, %v467, %v465
        %s471 = scalar_lea.vmem %s1, 3
        %v472 = vld [vmem:[%s471] ss:$8 sm:$0x3]
        %v474 = vlaneseq
        %v475 = vshrl.u32 %v474, 7
        %v476 = vsub.s32 0, %v475
        %v477 = vrot.slane %v472, %v476
        %v478 = vlaneseq
        %v479 = vshrl.u32 %v478, 7
        %v480 = vsub.s32 1, %v479
        %v481 = vrot.slane %v472, %v480
        %v484 = vmul.f32 %v470, %v477
        %v485 = vmul.f32 %v469, %v481
        %v488 = vrot.slane %v484, 4
        %v489 = vrot.slane %v485, 4
        %492 = vst [vmem:[#allocation2 + $0x10] sm:$0xf0] %v488
        %493 = vst [vmem:[#allocation2 + $0x18] sm:$0xf0] %v489
        %494 = vst [vmem:[#allocation2 + $0x20] sm:$0xf] %v383
        %495 = vst [vmem:[#allocation2 + $0x28] sm:$0xf] %v384
        %496 = vrot.lane.b32.xlu0 %v383, 127
        %v497 = vpop.permute.xlu0 %496
        %498 = vrot.lane.b32.xlu0 %v384, 127
        %v499 = vpop.permute.xlu0 %498
        %vm500 = vcmp.lt.s32.totalorder %v390, 127
        %v501 = vsel %vm500, %v497, %v499
        %v502 = vsel %vm500, %v499, %v497
        %s503 = scalar_lea.vmem %s1, 5
        %v504 = vld [vmem:[%s503] ss:$8 sm:$0x3]
        %v506 = vlaneseq
        %v507 = vshrl.u32 %v506, 7
        %v508 = vsub.s32 0, %v507
        %v509 = vrot.slane %v504, %v508
        %v510 = vlaneseq
        %v511 = vshrl.u32 %v510, 7
        %v512 = vsub.s32 1, %v511
        %v513 = vrot.slane %v504, %v512
        %v516 = vmul.f32 %v501, %v509
        %v517 = vmul.f32 %v502, %v513
        %v520 = vrot.slane %v516, 4
        %v521 = vrot.slane %v517, 4
        %524 = vst [vmem:[#allocation2 + $0x20] sm:$0xf0] %v520
        %525 = vst [vmem:[#allocation2 + $0x28] sm:$0xf0] %v521
        %526 = vrot.lane.b32.xlu0 %v383, 113
        %v527 = vpop.permute.xlu0 %526
        %528 = vrot.lane.b32.xlu0 %v384, 113
        %v529 = vpop.permute.xlu0 %528
        %vm530 = vcmp.lt.s32.totalorder %v390, 113
        %v531 = vsel %vm530, %v527, %v529
        %v532 = vsel %vm530, %v529, %v527
        %s533 = scalar_lea.vmem %s1, 6
        %v534 = vld [vmem:[%s533] ss:$8 sm:$0x3]
        %v536 = vlaneseq
        %v537 = vshrl.u32 %v536, 7
        %v538 = vsub.s32 0, %v537
        %v539 = vrot.slane %v534, %v538
        %v540 = vlaneseq
        %v541 = vshrl.u32 %v540, 7
        %v542 = vsub.s32 1, %v541
        %v543 = vrot.slane %v534, %v542
        %v546 = vmul.f32 %v531, %v539
        %v547 = vmul.f32 %v532, %v543
        %548 = vst [vmem:[#allocation2 + $0x30] sm:$0xf] %v546
        %549 = vst [vmem:[#allocation2 + $0x38] sm:$0xf] %v547
        %550 = vrot.lane.b32.xlu0 %v383, 112
        %v551 = vpop.permute.xlu0 %550
        %552 = vrot.lane.b32.xlu0 %v384, 112
        %v553 = vpop.permute.xlu0 %552
        %vm554 = vcmp.lt.s32.totalorder %v390, 112
        %v555 = vsel %vm554, %v551, %v553
        %v556 = vsel %vm554, %v553, %v551
        %s557 = scalar_lea.vmem %s1, 7
        %v558 = vld [vmem:[%s557] ss:$8 sm:$0x3]
        %v560 = vlaneseq
        %v561 = vshrl.u32 %v560, 7
        %v562 = vsub.s32 0, %v561
        %v563 = vrot.slane %v558, %v562
        %v564 = vlaneseq
        %v565 = vshrl.u32 %v564, 7
        %v566 = vsub.s32 1, %v565
        %v567 = vrot.slane %v558, %v566
        %v570 = vmul.f32 %v555, %v563
        %v571 = vmul.f32 %v556, %v567
        %v574 = vrot.slane %v570, 4
        %v575 = vrot.slane %v571, 4
        %578 = vst [vmem:[#allocation2 + $0x30] sm:$0xf0] %v574
        %579 = vst [vmem:[#allocation2 + $0x38] sm:$0xf0] %v575
        %580 = vrot.lane.b32.xlu0 %v383, 111
        %v581 = vpop.permute.xlu0 %580
        %582 = vrot.lane.b32.xlu0 %v384, 111
        %v583 = vpop.permute.xlu0 %582
        %vm584 = vcmp.lt.s32.totalorder %v390, 111
        %v585 = vsel %vm584, %v581, %v583
        %v586 = vsel %vm584, %v583, %v581
        %s587 = scalar_lea.vmem %s1, 16
        %v588 = vld [vmem:[%s587] ss:$8 sm:$0x3]
        %v590 = vlaneseq
        %v591 = vshrl.u32 %v590, 7
        %v592 = vsub.s32 0, %v591
        %v593 = vrot.slane %v588, %v592
        %v594 = vlaneseq
        %v595 = vshrl.u32 %v594, 7
        %v596 = vsub.s32 1, %v595
        %v597 = vrot.slane %v588, %v596
        %v600 = vmul.f32 %v585, %v593
        %v601 = vmul.f32 %v586, %v597
        %602 = vst [vmem:[#allocation2 + $0x40] sm:$0xf] %v600
        %603 = vst [vmem:[#allocation2 + $0x48] sm:$0xf] %v601
        %v604 = vld [vmem:[%s4] sm:$0x3]
        %v605 = vld [vmem:[#allocation2] sm:$0xff]
        %v606 = vld [vmem:[#allocation2 + $0x8] sm:$0xff]
        %v607 = vld [vmem:[#allocation2 + $0x10] sm:$0xff]
        %v608 = vld [vmem:[#allocation2 + $0x18] sm:$0xff]
        %v609 = vld [vmem:[#allocation2 + $0x20] sm:$0xff]
        %v610 = vld [vmem:[#allocation2 + $0x28] sm:$0xff]
        %v611 = vld [vmem:[#allocation2 + $0x30] sm:$0xff]
        %v612 = vld [vmem:[#allocation2 + $0x38] sm:$0xff]
        %v613 = vld [vmem:[#allocation2 + $0x40] sm:$0xf]
        %v614 = vld [vmem:[#allocation2 + $0x48] sm:$0xf]
        %v615 = vpack.c.bf16 %v607, %v605
        %v616 = vpack.c.bf16 %v608, %v606
        %v617 = vpack.c.bf16 %v611, %v609
        %v618 = vpack.c.bf16 %v612, %v610
        %v619 = vpack.c.bf16 %v613, %v613
        %v620 = vpack.c.bf16 %v614, %v614
        %v621 = vld [vmem:[%s5] sm:$0xf]
        %623 = vset.pattern.permute.xlu0 0
        %624 = vperm.xlu0 %623, %v621
        %v625 = vpop.permute.xlu0 %624
        %vm627 = vcmask 293888
        %v629 = vsel %vm627, %v604, 0
        %vm631 = vcmask 1041408
        %v633 = vsel %vm631, %v619, 0
        %v636 = vsel %vm631, %v620, 0
        %638 = vmatprep.subr.bf16.mxu0 %v616
        %639 = vmatpush1.bf16.msra.mxu0 %v615
        %640 = vmatprep.subr.bf16.mxu0 %v618
        %641 = vmatpush1.bf16.msra.mxu0 %v617
        %642 = vmatprep.subr.bf16.mxu0 %v636
        %643 = vmatpush1.bf16.msra.mxu0 %v633
        %644 = vmatprep.subr.bf16.mxu0 0
        %645 = vmatpush1.bf16.msra.mxu0 0
        %646 = vmatprep.subr.bf16.mxu0 0
        %647 = vmatpush1.bf16.msra.mxu0 0
        %648 = vmatprep.subr.bf16.mxu0 0
        %649 = vmatpush1.bf16.msra.mxu0 0
        %650 = vmatprep.subr.bf16.mxu0 0
        %651 = vmatpush1.bf16.msra.mxu0 0
        %652 = vmatprep.subr.bf16.mxu0 0
        %653 = vmatpush1.bf16.msra.mxu0 0
        %654 = vmatprep.subr.bf16.mxu0 0
        %655 = vmatpush1.bf16.msra.mxu0 0
        %656 = vmatprep.subr.bf16.mxu0 0
        %657 = vmatpush1.bf16.msra.mxu0 0
        %658 = vmatprep.subr.bf16.mxu0 0
        %659 = vmatpush1.bf16.msra.mxu0 0
        %660 = vmatprep.subr.bf16.mxu0 0
        %661 = vmatpush1.bf16.msra.mxu0 0
        %662 = vmatprep.subr.bf16.mxu0 0
        %663 = vmatpush1.bf16.msra.mxu0 0
        %664 = vmatprep.subr.bf16.mxu0 0
        %665 = vmatpush1.bf16.msra.mxu0 0
        %666 = vmatprep.subr.bf16.mxu0 0
        %667 = vmatpush1.bf16.msra.mxu0 0
        %668 = vmatprep.subr.bf16.mxu0 0
        %669 = vmatpush1.bf16.msra.mxu0 0
        %670 = vmatprep.mubr.bf16.mxu0 0
        %671 = vmatmul.mubr.bf16.gmra.mrb[0].mxu0 %v629
        %v672 = vpop.f32.mrb[0].mxu0
        %v673 = vadd.f32 %v625, %v672
        %v674 = vpop.f32.mrb[0].mxu0
        %v675 = vadd.f32 %v625, %v674
        %v676 = vpop.f32.mrb[0].mxu0
        %v677 = vpop.f32.mrb[0].mxu0
        %678 = vdwg.mxu0
        %v679 = vmax.f32 %v673, 0.0
        %v680 = vmax.f32 %v675, 0.0
        %v681 = vld [vmem:[%s6] sm:$0xf]
        %v682 = vld [vmem:[%s6 + $0x4] sm:$0xf]
        %v683 = vpack.c.bf16 %v679, %v679
        %v684 = vpack.c.bf16 %v680, %v680
        %v685 = vld [vmem:[%s7] sm:$0xff]
        %v686 = vld [vmem:[%s7 + $0x8] sm:$0xff]
        %688 = vset.pattern.permute.xlu0 0
        %689 = vperm.xlu0 %688, %v685
        %v690 = vpop.permute.xlu0 %689
        %693 = vset.pattern.permute.xlu0 0
        %694 = vperm.xlu0 %693, %v686
        %v695 = vpop.permute.xlu0 %694
        %v699 = vunpack.c.l.b16 %v681
        %v700 = vunpack.c.l.b16 %v682
        %v701 = vpack.c.b16 %v700, %v699
        %vm702 = vcmask 31744
        %v704 = vsel %vm702, %v701, 0
        %v707 = vsel %vm631, %v683, 0
        %v710 = vsel %vm631, %v684, 0
        %712 = vmatprep.subr.bf16.mxu0 %v710
        %713 = vmatpush1.bf16.msra.mxu0 %v707
        %714 = vmatprep.subr.bf16.mxu0 0
        %715 = vmatpush1.bf16.msra.mxu0 0
        %716 = vmatprep.subr.bf16.mxu0 0
        %717 = vmatpush1.bf16.msra.mxu0 0
        %718 = vmatprep.subr.bf16.mxu0 0
        %719 = vmatpush1.bf16.msra.mxu0 0
        %720 = vmatprep.subr.bf16.mxu0 0
        %721 = vmatpush1.bf16.msra.mxu0 0
        %722 = vmatprep.subr.bf16.mxu0 0
        %723 = vmatpush1.bf16.msra.mxu0 0
        %724 = vmatprep.subr.bf16.mxu0 0
        %725 = vmatpush1.bf16.msra.mxu0 0
        %726 = vmatprep.subr.bf16.mxu0 0
        %727 = vmatpush1.bf16.msra.mxu0 0
        %728 = vmatprep.subr.bf16.mxu0 0
        %729 = vmatpush1.bf16.msra.mxu0 0
        %730 = vmatprep.subr.bf16.mxu0 0
        %731 = vmatpush1.bf16.msra.mxu0 0
        %732 = vmatprep.subr.bf16.mxu0 0
        %733 = vmatpush1.bf16.msra.mxu0 0
        %734 = vmatprep.subr.bf16.mxu0 0
        %735 = vmatpush1.bf16.msra.mxu0 0
        %736 = vmatprep.subr.bf16.mxu0 0
        %737 = vmatpush1.bf16.msra.mxu0 0
        %738 = vmatprep.subr.bf16.mxu0 0
        %739 = vmatpush1.bf16.msra.mxu0 0
        %740 = vmatprep.subr.bf16.mxu0 0
        %741 = vmatpush1.bf16.msra.mxu0 0
        %742 = vmatprep.subr.bf16.mxu0 0
        %743 = vmatpush1.bf16.msra.mxu0 0
        %744 = vmatprep.mubr.bf16.mxu0 0
        %745 = vmatmul.mubr.bf16.gmra.mrb[0].mxu0 %v704
        %v746 = vpop.f32.mrb[0].mxu0
        %v747 = vadd.f32 %v690, %v746
        %v748 = vpop.f32.mrb[0].mxu0
        %v749 = vadd.f32 %v690, %v748
        %v750 = vpop.f32.mrb[0].mxu0
        %v751 = vadd.f32 %v695, %v750
        %v752 = vpop.f32.mrb[0].mxu0
        %v753 = vadd.f32 %v695, %v752
        %754 = vdwg.mxu0
        %v755 = vadd.f32 %v747, %v325
        %v756 = vadd.f32 %v749, %v326
        %v757 = vadd.f32 %v751, %v327
        %v758 = vadd.f32 %v753, %v328
        %v759 = vmax.f32 %v755, 0.0
        %v760 = vmax.f32 %v756, 0.0
        %v761 = vmax.f32 %v757, 0.0
        %v762 = vmax.f32 %v758, 0.0
        %763 = vst [vmem:[%s323] sm:$0xff] %v759
        %764 = vst [vmem:[%s323 + $0x8] sm:$0xff] %v760
        %765 = vst [vmem:[%s323 + $0x10] sm:$0xff] %v761
        %766 = vst [vmem:[%s323 + $0x18] sm:$0xff] %v762
        %s767 = sand.u32 %s206, 1
        %s768 = scalar_lea.sflag [#allocation5], %s767
        %s769 = sand.u32 %s206, 1
        %s770 = smul.addr %s769, 32
        %s771 = scalar_lea.vmem [#allocation6], %s770
        // Predicated region
        $region57: #{tpu_custom_call.1} parent=51 // pred_check
          %p772 = pneg %p216
        $region58: #{tpu_custom_call.1} parent=51 // pred_check_branch
          %774 = sbr.rel (%p772) target = $region60
        $region59: #{tpu_custom_call.1} parent=51 // pred_region
          %s776 = ssub.s32 512, 512
          %777 = vsyncadd %s768, %s776
          %s778 = smul.addr %s25, 4
          %s779 = smul.addr %s778, 128
          %s780 = scalar_lea.hbm %s8, %s779
          %s781 = sshll.u32 %s771, 4
          %s782 = int_to_ptr.vmem [resolvable:$true] %s781
          %787 = dma.vmem_to_hbm [thread:$0]  %s782, 512, %s780, %s768, 256, 256, 16
        $region60: #{tpu_custom_call.1} parent=51 // pred_fallthru
          _
      $region52: #{tpu_custom_call.1} parent=5 // pred_fallthru
        _
      %p788 = scmp.le.s32.totalorder 2, %s20
      // Predicated region
      $region61: #{tpu_custom_call.1} parent=5 // pred_check
        %p789 = pneg %p788
      $region62: #{tpu_custom_call.1} parent=5 // pred_check_branch
        %791 = sbr.rel (%p789) target = $region64
      $region63: #{tpu_custom_call.1} parent=5 // pred_region
        %s792 = ssub.s32 %s20, 2
        // Predicated region
        $region65: #{tpu_custom_call.1} parent=63 // pred_check
          %p793 = pneg %p222
        $region66: #{tpu_custom_call.1} parent=63 // pred_check_branch
          %795 = sbr.rel (%p793) target = $region68
        $region67: #{tpu_custom_call.1} parent=63 // pred_region
          %s796 = sand.u32 %s207, 1
          %s797 = scalar_lea.sflag [#allocation5], %s796
          %s798 = sand.u32 %s207, 1
          %s799 = smul.addr %s798, 32
          %s800 = scalar_lea.vmem [#allocation6], %s799
          %801 = dma.done %s797, 512
        $region68: #{tpu_custom_call.1} parent=63 // pred_fallthru
          _
      $region64: #{tpu_custom_call.1} parent=5 // pred_fallthru
        _
    $region6: #{tpu_custom_call.1} parent=1 // loop_footer
      %s24 = sadd.s32 1, %s20
    $region7: #{tpu_custom_call.1} parent=1 // loop_footer_branch
      %19 = sbr.rel target = $region3
    $region8: #{tpu_custom_call.1} parent=1 // loop_exit
      _
    %802 = vsyncpa [#allocation4], 1
    %s803 = scalar_lea.sflag [#allocation4], 1
    %804 = vsyncpa %s803, 1
    %805 = vsyncpa [#allocation5], 1
    %s806 = scalar_lea.sflag [#allocation5], 1
    %807 = vsyncpa %s806, 1

</llo_original>
